<compile_context>
chip_gen: v6e
topology: v6e:2x2x1
jax: 0.10.0
libtpu: 0.0.40
codegen_flags: <defaults>
</compile_context>

<pallas_src>
import math

import jax
import jax.numpy as jnp
from jax.experimental import pallas as pl
from jax.experimental.pallas import tpu as pltpu

_SQRT_HALF = math.sqrt(0.5)
_BLOCK_SET_BUDGET = 8 * 1024 * 1024   # bytes for one (x + res + out) block set
_VMEM_LIMIT = 32 * 1024 * 1024        # scoped-VMEM cap; safe per-core on v5e/v6e/v7x
_MIN_GRID_STEPS = 8                   # keep the row grid shardable across v7x's 2 TCs


def _row_tile(rows, row_bytes):
    """Largest multiple-of-8 row tile whose (x+res+out) block set fits the
    budget, capped so the grid keeps >= _MIN_GRID_STEPS steps.  A ragged last
    block is handled by the pl.cdiv grid (masked writes)."""
    if rows <= 8:
        return rows
    tr = (_BLOCK_SET_BUDGET // max(row_bytes, 1)) // 8 * 8
    tr = max(8, min(tr, rows))
    if rows >= _MIN_GRID_STEPS * 8:
        cap = max(8, (-(-rows // _MIN_GRID_STEPS)) // 8 * 8)
        tr = min(tr, cap)
    return tr


# ---------------------------------------------------------------------------
# Kernels
# ---------------------------------------------------------------------------

def _concat_dma_kernel(x_hbm, res_hbm, o_hbm, sem):
    # i == 1, lane-aligned: pure data movement.  Two strided HBM->HBM DMAs
    # write out[:, :H] = x and out[:, H:] = res at HBM roofline — no VMEM
    # staging, no per-step overhead.
    H = x_hbm.shape[-1]
    Hr = res_hbm.shape[-1]
    cx = pltpu.make_async_copy(x_hbm, o_hbm.at[:, pl.ds(0, H)], sem.at[0])
    cr = pltpu.make_async_copy(res_hbm, o_hbm.at[:, pl.ds(H, Hr)], sem.at[1])
    cx.start()
    cr.start()
    cx.wait()
    cr.wait()


def _aug_aliased_kernel(x_ref, res_ref, o_ref):
    # i >= 2 fast path: the output aliases `res`; only the first H lanes are
    # read/written, the res[..., H:] tail never leaves HBM.
    s = (res_ref[...].astype(jnp.float32)
         + x_ref[...].astype(jnp.float32)) * _SQRT_HALF
    o_ref[...] = s.astype(o_ref.dtype)


def _aug_generic_kernel(x_ref, res_ref, o_ref):
    # i >= 2 generic (cold/test-only) path: any H / Hr, full-width blocks.
    # Sub-128-lane stores are accepted here — real model sizes take the
    # aliased fast path above.
    H = x_ref.shape[-1]
    Hr = res_ref.shape[-1]
    s = (res_ref[:, :H].astype(jnp.float32)
         + x_ref[...].astype(jnp.float32)) * _SQRT_HALF
    o_ref[:, :H] = s.astype(o_ref.dtype)
    if Hr > H:  # static shape check at trace time
        o_ref[:, H:] = res_ref[:, H:].astype(o_ref.dtype)


# ---------------------------------------------------------------------------
# Wrapper
# ---------------------------------------------------------------------------

def augmented_residual(x, res, i):
    """Pallas implementation of AugmentedResidual.forward(x, res, i).

    x:   (B, L, H)
    res: (B, L, Hr)   (Hr == H at i == 1; Hr >= H, typically 2*H, at i >= 2)
    i:   static Python int (as at the PyTorch call site)

    For the i >= 2 fast path, donate `res` at the jit boundary
    (donate_argnums=1) so XLA honors the in-place alias of res into the
    output without a defensive copy.
    """
    B, L, H = x.shape
    Br, Lr, Hr = res.shape
    assert (B, L) == (Br, Lr), "batch/seq dims of x and res must match"
    rows = B * L

    if i == 1:
        # torch.cat-style dtype promotion.
        o_dtype = jnp.result_type(x.dtype, res.dtype)
        out_h = H + Hr
        if H % 128 == 0 and Hr % 128 == 0:
            x2 = x.reshape(rows, H).astype(o_dtype)
            res2 = res.reshape(rows, Hr).astype(o_dtype)
            isz = x2.dtype.itemsize
            out = pl.pallas_call(
                _concat_dma_kernel,
                out_shape=jax.ShapeDtypeStruct((rows, out_h), o_dtype),
                in_specs=[pl.BlockSpec(memory_space=pl.ANY),
                          pl.BlockSpec(memory_space=pl.ANY)],
                out_specs=pl.BlockSpec(memory_space=pl.ANY),
                scratch_shapes=[pltpu.SemaphoreType.DMA((2,))],
                cost_estimate=pl.CostEstimate(
                    flops=0, transcendentals=0,
                    bytes_accessed=2 * rows * out_h * isz),
            )(x2, res2)
            return out.reshape(B, L, out_h)
        # Unaligned hidden size (test-only sizes): a Pallas copy kernel would
        # lower to masked stores at a lane offset; route this cold path to
        # XLA's concat as recommended by the perf review.
        return jnp.concatenate([x.astype(o_dtype), res.astype(o_dtype)], axis=-1)

    # i >= 2
    assert Hr >= H, "res last dim must be at least x's hidden size"
    x2 = x.reshape(rows, H)
    res2 = res.reshape(rows, Hr)

    compiler_params = pltpu.CompilerParams(
        dimension_semantics=("parallel",),
        vmem_limit_bytes=_VMEM_LIMIT,
    )

    if H % 128 == 0 and x.dtype == res.dtype:
        # Lane-dense blocks over the first H lanes only; res is aliased into
        # the output so res[..., H:] passes through with zero HBM traffic.
        isz = x.dtype.itemsize
        row_bytes = 3 * H * isz
        tr = _row_tile(rows, row_bytes)
        out = pl.pallas_call(
            _aug_aliased_kernel,
            out_shape=jax.ShapeDtypeStruct((rows, Hr), res.dtype),
            grid_spec=pltpu.PrefetchScalarGridSpec(
                num_scalar_prefetch=0,
                grid=(pl.cdiv(rows, tr),),
                in_specs=[
                    pl.BlockSpec((tr, H), lambda r: (r, 0)),
                    pl.BlockSpec((tr, H), lambda r: (r, 0)),  # first H lanes of res
                ],
                out_specs=pl.BlockSpec((tr, H), lambda r: (r, 0)),
            ),
            input_output_aliases={1: 0},   # res -> out; untouched tail kept
            compiler_params=compiler_params,
            cost_estimate=pl.CostEstimate(
                flops=2 * rows * H, transcendentals=0,
                bytes_accessed=rows * row_bytes),
        )(x2, res2)
        return out.reshape(B, L, Hr)

    # Generic fallback (H not 128-aligned or dtype mix): full-width blocks.
    o_dtype = jnp.result_type(x.dtype, res.dtype)
    row_bytes = (H * x.dtype.itemsize + Hr * res.dtype.itemsize
                 + Hr * jnp.zeros((), o_dtype).dtype.itemsize)
    tr = _row_tile(rows, row_bytes)
    out = pl.pallas_call(
        _aug_generic_kernel,
        out_shape=jax.ShapeDtypeStruct((rows, Hr), o_dtype),
        grid_spec=pltpu.PrefetchScalarGridSpec(
            num_scalar_prefetch=0,
            grid=(pl.cdiv(rows, tr),),
            in_specs=[
                pl.BlockSpec((tr, H), lambda r: (r, 0)),
                pl.BlockSpec((tr, Hr), lambda r: (r, 0)),
            ],
            out_specs=pl.BlockSpec((tr, Hr), lambda r: (r, 0)),
        ),
        compiler_params=compiler_params,
        cost_estimate=pl.CostEstimate(
            flops=2 * rows * H, transcendentals=0,
            bytes_accessed=rows * row_bytes),
    )(x2, res2)
    return out.reshape(B, L, Hr)


# ---------------------------------------------------------------------------
# Reference + self-test
# ---------------------------------------------------------------------------

def _reference(x, res, i):
    if i == 1:
        return jnp.concatenate([x, res], axis=-1)
    H = x.shape[-1]
    xa = (res[:, :, :H] + x) * math.sqrt(0.5)
    return jnp.concatenate([xa, res[:, :, H:]], axis=-1)


if __name__ == "__main__":
    key = jax.random.PRNGKey(0)
    B, L = 2, 8

    aug = jax.jit(augmented_residual, static_argnums=2)
    # Donating `res` lets XLA honor the in-place alias of the i >= 2 fast
    # path (no defensive copy of res), which is what makes the tail
    # passthrough actually free.
    aug_donate_res = jax.jit(augmented_residual, static_argnums=2,
                             donate_argnums=1)

    # H=128 exercises the DMA-concat + aliased fast paths; H=32 the cold paths.
    for H in (128, 32):
        k1, k2, k3, k4 = jax.random.split(jax.random.fold_in(key, H), 4)

        # --- i == 1: res has the same hidden size as x (first block) ---
        x1 = jax.random.normal(k1, (B, L, H), dtype=jnp.float32)
        r1 = jax.random.normal(k2, (B, L, H), dtype=jnp.float32)
        ref1 = _reference(x1, r1, 1)
        out1 = jax.block_until_ready(aug(x1, r1, 1))
        assert out1.shape == (B, L, 2 * H)
        assert jnp.allclose(out1, ref1, atol=1e-6, rtol=1e-6)

        # --- i >= 2: res carries the previous augmented output (2*H wide) ---
        x2 = jax.random.normal(k3, (B, L, H), dtype=jnp.float32)
        r2 = jax.random.normal(k4, (B, L, 2 * H), dtype=jnp.float32)
        ref2 = _reference(x2, r2, 2)          # computed before r2 is donated
        fn = aug_donate_res if H % 128 == 0 else aug
        out2 = jax.block_until_ready(fn(x2, r2, 2))
        assert out2.shape == (B, L, 2 * H)
        assert jnp.allclose(out2, ref2, atol=1e-6, rtol=1e-6)

    print("KERNEL_OK")
</pallas_src>

<mosaic_0001>
module attributes {stable_mosaic.version = 11 : i64} {
  func.func @_concat_dma_kernel(%arg0: memref<16x128xf32, #tpu.memory_space<any>>, %arg1: memref<16x128xf32, #tpu.memory_space<any>>, %arg2: memref<16x256xf32, #tpu.memory_space<any>>, %arg3: memref<2x!tpu.dma_semaphore, #tpu.memory_space<semaphore_mem>>) attributes {dimension_semantics = [], scalar_prefetch = 0 : i64, scratch_operands = 1 : i64, tpu.core_type = #tpu.core_type<tc>} {
    %c0_i32 = arith.constant 0 : i32
    %c0_i32_0 = arith.constant 0 : i32
    %c0_i32_1 = arith.constant 0 : i32
    %0 = tpu.memref_slice %arg2[%c0_i32_0, %c0_i32_1] : memref<16x256xf32, #tpu.memory_space<any>> -> memref<16x128xf32, #tpu.memory_space<any>>
    %1 = tpu.memref_slice %arg3[%c0_i32] : memref<2x!tpu.dma_semaphore, #tpu.memory_space<semaphore_mem>> -> memref<1x!tpu.dma_semaphore, #tpu.memory_space<semaphore_mem>>
    %2 = tpu.memref_squeeze %1 : memref<1x!tpu.dma_semaphore, #tpu.memory_space<semaphore_mem>> -> memref<!tpu.dma_semaphore, #tpu.memory_space<semaphore_mem>>
    tpu.enqueue_dma source(%arg0 : memref<16x128xf32, #tpu.memory_space<any>>) target(%0 : memref<16x128xf32, #tpu.memory_space<any>>) target_semaphore(%2 : memref<!tpu.dma_semaphore, #tpu.memory_space<semaphore_mem>>)
    %c1_i32 = arith.constant 1 : i32
    %c0_i32_2 = arith.constant 0 : i32
    %c128_i32 = arith.constant 128 : i32
    %3 = tpu.memref_slice %arg2[%c0_i32_2, %c128_i32] : memref<16x256xf32, #tpu.memory_space<any>> -> memref<16x128xf32, #tpu.memory_space<any>>
    %4 = tpu.memref_slice %arg3[%c1_i32] : memref<2x!tpu.dma_semaphore, #tpu.memory_space<semaphore_mem>> -> memref<1x!tpu.dma_semaphore, #tpu.memory_space<semaphore_mem>>
    %5 = tpu.memref_squeeze %4 : memref<1x!tpu.dma_semaphore, #tpu.memory_space<semaphore_mem>> -> memref<!tpu.dma_semaphore, #tpu.memory_space<semaphore_mem>>
    tpu.enqueue_dma source(%arg1 : memref<16x128xf32, #tpu.memory_space<any>>) target(%3 : memref<16x128xf32, #tpu.memory_space<any>>) target_semaphore(%5 : memref<!tpu.dma_semaphore, #tpu.memory_space<semaphore_mem>>)
    %c0_i32_3 = arith.constant 0 : i32
    %c0_i32_4 = arith.constant 0 : i32
    %c0_i32_5 = arith.constant 0 : i32
    %6 = tpu.memref_slice %arg2[%c0_i32_4, %c0_i32_5] : memref<16x256xf32, #tpu.memory_space<any>> -> memref<16x128xf32, #tpu.memory_space<any>>
    %7 = tpu.memref_slice %arg3[%c0_i32_3] : memref<2x!tpu.dma_semaphore, #tpu.memory_space<semaphore_mem>> -> memref<1x!tpu.dma_semaphore, #tpu.memory_space<semaphore_mem>>
    %8 = tpu.memref_squeeze %7 : memref<1x!tpu.dma_semaphore, #tpu.memory_space<semaphore_mem>> -> memref<!tpu.dma_semaphore, #tpu.memory_space<semaphore_mem>>
    tpu.wait_dma2 semaphore(%8 : memref<!tpu.dma_semaphore, #tpu.memory_space<semaphore_mem>>) src(%arg0 : memref<16x128xf32, #tpu.memory_space<any>>) dst(%6 : memref<16x128xf32, #tpu.memory_space<any>>)
    %c1_i32_6 = arith.constant 1 : i32
    %c0_i32_7 = arith.constant 0 : i32
    %c128_i32_8 = arith.constant 128 : i32
    %9 = tpu.memref_slice %arg2[%c0_i32_7, %c128_i32_8] : memref<16x256xf32, #tpu.memory_space<any>> -> memref<16x128xf32, #tpu.memory_space<any>>
    %10 = tpu.memref_slice %arg3[%c1_i32_6] : memref<2x!tpu.dma_semaphore, #tpu.memory_space<semaphore_mem>> -> memref<1x!tpu.dma_semaphore, #tpu.memory_space<semaphore_mem>>
    %11 = tpu.memref_squeeze %10 : memref<1x!tpu.dma_semaphore, #tpu.memory_space<semaphore_mem>> -> memref<!tpu.dma_semaphore, #tpu.memory_space<semaphore_mem>>
    tpu.wait_dma2 semaphore(%11 : memref<!tpu.dma_semaphore, #tpu.memory_space<semaphore_mem>>) src(%arg1 : memref<16x128xf32, #tpu.memory_space<any>>) dst(%9 : memref<16x128xf32, #tpu.memory_space<any>>)
    return
  }
}

</mosaic_0001>

<llo_original>
// kernel: augmented_residual.1
$region0: #{augmented_residual.1}
  #allocation0 [shape = 'u32[]', space=smem, size = 0x4, offset = 0x4, fixed_abs, tag = 'smem constant byte address 0x4 - core index']
  #allocation1 [shape = 'u32[144,128]{1,0:T(1,128)}', space=vmem, size = 0x12000, scoped, tag = 'internal scratch']
  #allocation2 [shape = 's32[2]{0}', space=sflag, size = 0x8, scoped, tag = 'scratch operand']
  #allocation3 [shape = 's32[]', space=sflag, size = 0x4, offset = 0, fixed_abs, tag = 'sflag constant byte address 0x0 - dummy sync flag']
  #allocation5 [shape = 's32[]', space=sflag, size = 0x4, offset = 0, fixed_abs, tag = 'sflag constant byte address 0x0 - dummy sync flag']
  %s0 = inlined_call_operand.hbm [shape: f32[16,128], index: 0, kind: input, shape index: {}]
  %s1 = inlined_call_operand.hbm [shape: f32[16,128], index: 1, kind: input, shape index: {}]
  %s2 = inlined_call_operand.hbm [shape: f32[16,256], index: 2, kind: output, shape index: {}]
  %s3 = sld [smem:[#allocation0]]
  $region2: #{augmented_residual.1} parent=0
    _
  %s5 = ssub.s32 1, %s3
  %s6 = scalar_select 0, %s5, %s3
  $region1: #{augmented_residual.1} parent=0
    #allocation4 [shape = 'u32[3]{0}', space=smem, size = 0xc, scoped, tag = 'DMA stride descriptor']
    #allocation6 [shape = 'u32[3]{0}', space=smem, size = 0xc, scoped, tag = 'DMA stride descriptor']
    %s8 = sshll.u32 1, 14
    %s9 = sxor.u32 4294967295, %s8
    %13 = sst [smem:[#allocation4]] 128
    %s14 = scalar_lea.smem [#allocation4], 1
    %15 = sst [smem:[%s14]] 256
    %s16 = scalar_lea.smem [#allocation4], 2
    %17 = sst [smem:[%s16]] 8
    %19 = dma.general %s0, 256, %s2, [#allocation2], 131072, [#allocation4], 0, 0
    %s20 = scalar_lea.hbm %s2, 128
    %s21 = scalar_lea.sflag [#allocation2], 1
    %s23 = sshll.u32 1, 14
    %s24 = sxor.u32 4294967295, %s23
    %28 = sst [smem:[#allocation6]] 128
    %s29 = scalar_lea.smem [#allocation6], 1
    %30 = sst [smem:[%s29]] 256
    %s31 = scalar_lea.smem [#allocation6], 2
    %32 = sst [smem:[%s31]] 8
    %34 = dma.general %s1, 256, %s20, %s21, 131072, [#allocation6], 0, 0
    %s35 = smul.u32 8, 2
    %s36 = smul.u32 %s35, 1
    %s37 = sshll.u32 %s36, 4
    %38 = dma.done [#allocation2], %s37
    %s39 = sshll.u32 %s36, 4
    %40 = dma.done %s21, %s39
  %41 = vsyncmov [#allocation2]
  %s42 = vpop.sfrf %41
  %p43 = scmp.eq.s32.totalorder %s42, 0
  %p44 = pneg %p43
  %46 = shalt.err (%p44)
  %s47 = scalar_lea.sflag [#allocation2], 1
  %48 = vsyncmov %s47
  %s49 = vpop.sfrf %48
  %p50 = scmp.eq.s32.totalorder %s49, 0
  %p51 = pneg %p50
  %53 = shalt.err (%p51)

</llo_original>
